<compile_context>
chip_gen: v5e
topology: v5e:2x2
jax: 0.10.0
libtpu: 0.0.40
codegen_flags: <defaults>
</compile_context>

<pallas_src>
import functools

import jax
import jax.numpy as jnp
from jax import lax
from jax.experimental import pallas as pl
from jax.experimental.pallas import tpu as pltpu


def _round_up(x, m):
    return ((x + m - 1) // m) * m


def _tpu_kind():
    try:
        return jax.devices()[0].device_kind.lower()
    except Exception:
        return ""


def _vmem_budget_bytes(kind):
    if "v7" in kind or "7x" in kind:
        return 48 * 2**20        # v7x: 64 MiB physical per TC -> stay under
    if "v4" in kind or "v5" in kind or "v6" in kind:
        return 96 * 2**20        # 128 MiB physical VMEM
    return 32 * 2**20            # conservative default for unknown parts


# ---------------------------------------------------------------------------
# Fast path: x2 fully resident in VMEM (DMA'd from HBM once), plain softmax.
# ---------------------------------------------------------------------------
def _resident_kernel(x1_ref, x2_ref, o_ref):
    x1 = x1_ref[...]          # (tb, D) native dtype
    x2t = x2_ref[...]         # (N,  D) native dtype, full x2

    # scores[b, n] = sum_d x1[b, d] * x2[n, d]  == (x1 * x2).sum(-1) w/ broadcast
    s = lax.dot_general(
        x1, x2t,
        dimension_numbers=(((1,), (1,)), ((), ())),
        preferred_element_type=jnp.float32,
    )                                                       # (tb, N) f32

    m = jnp.max(s, axis=-1, keepdims=True)
    p = jnp.exp(s - m)
    l = jnp.sum(p, axis=-1, keepdims=True)
    out = jnp.dot(p.astype(x2t.dtype), x2t, preferred_element_type=jnp.float32)
    o_ref[...] = (out / l).astype(o_ref.dtype)              # exact normalization


# ---------------------------------------------------------------------------
# Fallback: flash-style online softmax, x2 streamed over N in (tn, D) tiles.
# ---------------------------------------------------------------------------
def _streamed_kernel(x1_ref, x2_ref, o_ref, m_sc, l_sc, acc_sc, *,
                     n_actual, tn, n_even):
    j = pl.program_id(1)

    @pl.when(j == 0)
    def _():
        m_sc[...] = jnp.full_like(m_sc, -jnp.inf)
        l_sc[...] = jnp.zeros_like(l_sc)
        acc_sc[...] = jnp.zeros_like(acc_sc)

    x1 = x1_ref[...]          # (tb, D)
    x2t = x2_ref[...]         # (tn, D)

    if not n_even:
        # Zero possibly-garbage OOB rows of the (partial) last tile so they
        # cannot contaminate the value matmul (NaN-safe).
        row = j * tn + lax.broadcasted_iota(jnp.int32, (x2t.shape[0], 1), 0)
        x2t = jnp.where(row < n_actual, x2t, jnp.zeros_like(x2t))

    s = lax.dot_general(
        x1, x2t,
        dimension_numbers=(((1,), (1,)), ((), ())),
        preferred_element_type=jnp.float32,
    )                                                       # (tb, tn) f32

    if not n_even:
        col = j * tn + lax.broadcasted_iota(jnp.int32, s.shape, 1)
        s = jnp.where(col < n_actual, s, -1e30)

    m_prev = m_sc[...]                                      # (tb, 1)
    m_new = jnp.maximum(m_prev, jnp.max(s, axis=-1, keepdims=True))
    alpha = jnp.exp(m_prev - m_new)
    p = jnp.exp(s - m_new)

    l_sc[...] = alpha * l_sc[...] + jnp.sum(p, axis=-1, keepdims=True)
    acc_sc[...] = alpha * acc_sc[...] + jnp.dot(
        p.astype(x2t.dtype), x2t, preferred_element_type=jnp.float32)
    m_sc[...] = m_new

    @pl.when(j == pl.num_programs(1) - 1)
    def _():
        o_ref[...] = (acc_sc[...] / l_sc[...]).astype(o_ref.dtype)


def model_forward(x1, x2):
    """x1: (B, 1, D) or (B, D); x2: (N, D). Returns (B, D)."""
    x1_2d = x1.reshape(x1.shape[0], x1.shape[-1]) if x1.ndim == 3 else x1
    B, D = x1_2d.shape
    N, D2 = x2.shape
    assert D == D2

    out_dtype = x1_2d.dtype
    in_itemsize = jnp.dtype(x2.dtype).itemsize
    out_itemsize = jnp.dtype(out_dtype).itemsize

    kind = _tpu_kind()
    vmem_budget = _vmem_budget_bytes(kind)
    is_v7x = ("v7" in kind) or ("7x" in kind)

    # Batch tile: full B for tiny batches, otherwise a multiple of 8 (up to
    # 256 for the 256-wide MXU). The last B tile may be partial; OOB rows stay
    # garbage-local (softmax/output are row-independent) and OOB writes drop.
    tb = B if B <= 8 else min(256, (B // 8) * 8)
    b_tiles = pl.cdiv(B, tb)

    flops = 4 * B * N * D
    b_sem = pltpu.CORE_PARALLEL if (is_v7x and b_tiles >= 2) else pltpu.PARALLEL

    # Resident-x2 feasibility: x2 + double-buffered x1/out tiles + f32
    # intermediates ((tb, N) scores and probs) under the scoped VMEM budget.
    resident_bytes = (
        N * D * in_itemsize                         # x2, single buffer
        + 2 * tb * D * (in_itemsize + out_itemsize) # double-buffered x1 / out
        + 2 * tb * N * 4                            # scores + probs (f32)
        + tb * D * 4                                # value-matmul result (f32)
    )
    use_resident = resident_bytes <= vmem_budget - 8 * 2**20

    if use_resident:
        cost = pl.CostEstimate(
            flops=flops,
            transcendentals=B * N,
            bytes_accessed=(B * D + N * D) * in_itemsize + B * D * out_itemsize,
        )
        return pl.pallas_call(
            _resident_kernel,
            out_shape=jax.ShapeDtypeStruct((B, D), out_dtype),
            grid_spec=pltpu.PrefetchScalarGridSpec(
                num_scalar_prefetch=0,
                grid=(b_tiles,),
                in_specs=[
                    pl.BlockSpec((tb, D), lambda i: (i, 0)),  # x1 tile
                    pl.BlockSpec((N, D), lambda i: (0, 0)),   # x2 resident (1 DMA)
                ],
                out_specs=pl.BlockSpec((tb, D), lambda i: (i, 0)),
            ),
            compiler_params=pltpu.CompilerParams(
                dimension_semantics=(b_sem,),
                vmem_limit_bytes=vmem_budget,
            ),
            cost_estimate=cost,
        )(x1_2d, x2)

    # ---------------- streamed fallback (large x2) ----------------
    target_tile_bytes = 2 * 2**20                   # ~2 MiB per x2 buffer
    tn = max(8, min(4096, (target_tile_bytes // max(1, D * in_itemsize)) // 8 * 8))
    tn = min(tn, _round_up(N, 8))
    while tn > 8 and 3 * tn * D * in_itemsize > vmem_budget // 2:
        tn = max(8, (tn // 2) // 8 * 8)
    n_tiles = pl.cdiv(N, tn)
    n_even = (N % tn == 0)

    kernel = functools.partial(_streamed_kernel, n_actual=N, tn=tn, n_even=n_even)
    cost = pl.CostEstimate(
        flops=flops,
        transcendentals=2 * B * N,
        bytes_accessed=(B * D + b_tiles * N * D) * in_itemsize
        + B * D * out_itemsize,
    )

    return pl.pallas_call(
        kernel,
        out_shape=jax.ShapeDtypeStruct((B, D), out_dtype),
        grid_spec=pltpu.PrefetchScalarGridSpec(
            num_scalar_prefetch=0,
            grid=(b_tiles, n_tiles),
            in_specs=[
                pl.BlockSpec((tb, D), lambda i, j: (i, 0)),   # x1 resident over j
                pl.BlockSpec((tn, D), lambda i, j: (j, 0)),   # x2 streamed over N
            ],
            out_specs=pl.BlockSpec((tb, D), lambda i, j: (i, 0)),
            scratch_shapes=[
                pltpu.VMEM((tb, 1), jnp.float32),   # m (running max)
                pltpu.VMEM((tb, 1), jnp.float32),   # l (running denom)
                pltpu.VMEM((tb, D), jnp.float32),   # acc (unnormalized output)
            ],
        ),
        compiler_params=pltpu.CompilerParams(
            dimension_semantics=(b_sem, pltpu.ARBITRARY),
            vmem_limit_bytes=vmem_budget,
        ),
        cost_estimate=cost,
    )(x1_2d, x2)


if __name__ == "__main__":
    key = jax.random.PRNGKey(0)
    k1, k2 = jax.random.split(key)

    B, N, D = 2, 65, 48
    # Broadcast-valid analogue of the torch test inputs (x1: (2, 48), x2: (65, 48)).
    x1 = jax.random.normal(k1, (B, 1, D), dtype=jnp.float32)
    x2 = jax.random.normal(k2, (N, D), dtype=jnp.float32)

    out = model_forward(x1, x2)
    jax.block_until_ready(out)

    # Reference in plain JAX (same semantics as the torch module).
    qk = jax.nn.softmax((x1 * x2[None, :, :]).sum(-1), axis=-1)  # (B, N)
    ref = qk @ x2                                                # (B, D)
    assert out.shape == (B, D)
    assert jnp.allclose(out, ref, atol=1e-4, rtol=1e-4), float(
        jnp.max(jnp.abs(out - ref)))

    print("KERNEL_OK")
</pallas_src>

<mosaic_0001>
module attributes {stable_mosaic.version = 11 : i64} {
  func.func @_resident_kernel(%arg0: i32, %arg1: memref<2x48xf32, #tpu.memory_space<vmem>>, %arg2: memref<65x48xf32, #tpu.memory_space<vmem>>, %arg3: memref<2x48xf32, #tpu.memory_space<vmem>>) attributes {dimension_semantics = [#tpu.dimension_semantics<parallel>], iteration_bounds = array<i64: 1>, scalar_prefetch = 0 : i64, scratch_operands = 0 : i64, tpu.core_type = #tpu.core_type<tc>, window_params = [{transform_indices = @transform_0, window_bounds = array<i64: 2, 48>}, {pipeline_mode = #tpu.pipeline_mode<synchronous>, transform_indices = @transform_1, window_bounds = array<i64: 65, 48>}, {transform_indices = @transform_2, window_bounds = array<i64: 2, 48>}]} {
    %c0 = arith.constant 0 : index
    %c0_0 = arith.constant 0 : index
    %0 = vector.load %arg1[%c0, %c0_0] : memref<2x48xf32, #tpu.memory_space<vmem>>, vector<2x48xf32>
    %c0_1 = arith.constant 0 : index
    %c0_2 = arith.constant 0 : index
    %1 = vector.load %arg2[%c0_1, %c0_2] : memref<65x48xf32, #tpu.memory_space<vmem>>, vector<65x48xf32>
    %cst = arith.constant dense<0.000000e+00> : vector<2x65xf32>
    %2 = tpu.matmul %0, %1, %cst {dimension_numbers = #tpu.dot_dimension_numbers<[1], [1], [0], [0], [0, 0, 1, 0], [], []>} : vector<2x48xf32>, vector<65x48xf32>, vector<2x65xf32> -> vector<2x65xf32>
    %cst_3 = arith.constant dense<0xFF800000> : vector<2xf32>
    %3 = vector.multi_reduction <maximumf>, %2, %cst_3 [1] : vector<2x65xf32> to vector<2xf32>
    %4 = vector.shape_cast %3 : vector<2xf32> to vector<2x1xf32>
    %5 = vector.broadcast %4 : vector<2x1xf32> to vector<2x65xf32>
    %6 = arith.subf %2, %5 : vector<2x65xf32>
    %7 = math.exp %6 : vector<2x65xf32>
    %cst_4 = arith.constant dense<0.000000e+00> : vector<2xf32>
    %8 = vector.multi_reduction <add>, %7, %cst_4 [1] : vector<2x65xf32> to vector<2xf32>
    %9 = vector.shape_cast %8 : vector<2xf32> to vector<2x1xf32>
    %cst_5 = arith.constant dense<0.000000e+00> : vector<2x48xf32>
    %10 = tpu.matmul %7, %1, %cst_5 {dimension_numbers = #tpu.dot_dimension_numbers<[1], [0], [0], [1], [0, 0, 1, 1], [], []>} : vector<2x65xf32>, vector<65x48xf32>, vector<2x48xf32> -> vector<2x48xf32>
    %11 = vector.broadcast %9 : vector<2x1xf32> to vector<2x48xf32>
    %12 = arith.divf %10, %11 : vector<2x48xf32>
    %c0_6 = arith.constant 0 : index
    %c0_7 = arith.constant 0 : index
    %13 = vector.load %arg3[%c0_6, %c0_7] : memref<2x48xf32, #tpu.memory_space<vmem>>, vector<2x48xf32>
    tpu.vector_store %arg3[%c0_6, %c0_7], %12 {strides = array<i32>} : memref<2x48xf32, #tpu.memory_space<vmem>>, vector<2x48xf32>,
    return
  }
  func.func @transform_0(%arg0: i32) -> (i32, i32) {
    %c0_i32 = arith.constant 0 : i32
    %c0_i32_0 = arith.constant 0 : i32
    return %arg0, %c0_i32 : i32, i32
  }
  func.func @transform_1(%arg0: i32) -> (i32, i32) {
    %c0_i32 = arith.constant 0 : i32
    %c0_i32_0 = arith.constant 0 : i32
    %c0_i32_1 = arith.constant 0 : i32
    return %c0_i32, %c0_i32_0 : i32, i32
  }
  func.func @transform_2(%arg0: i32) -> (i32, i32) {
    %c0_i32 = arith.constant 0 : i32
    %c0_i32_0 = arith.constant 0 : i32
    return %arg0, %c0_i32 : i32, i32
  }
}

</mosaic_0001>

<llo_original>
// kernel: tpu_custom_call.1
$region0: #{tpu_custom_call.1}
  #allocation0 [shape = 'u32[]', space=smem, size = 0x4, offset = 0x4, fixed_abs, tag = 'smem constant byte address 0x4 - core index']
  #allocation1 [shape = 'u32[72,128]{1,0:T(1,128)}', space=vmem, size = 0x9000, scoped, tag = 'internal scratch']
  %s0 = inlined_call_operand.vmem [shape: f32[2,48], index: 0, kind: input, shape index: {}]
  %s1 = inlined_call_operand.vmem [shape: f32[65,48], index: 1, kind: input, shape index: {}]
  %s2 = inlined_call_operand.hbm [shape: f32[2,48], index: 2, kind: output, shape index: {}]
  %s3 = sld [smem:[#allocation0]]
  $region18: #{tpu_custom_call.1} parent=0
    _
  %s5 = ssub.s32 1, %s3
  %s6 = scalar_select 0, %s5, %s3
  $region1: #{tpu_custom_call.1} parent=0
    #allocation2 [shape = 'u8[1024]{0}', space=vmem, size = 0x400, scoped, tag = 'output window, operand 0, single buffered']
    #allocation3 [shape = 's32[1]{0}', space=sflag, size = 0x4, scoped, tag = 'scoped memory for tpu_custom_call.1']
    %7 = vsyncpa [#allocation3], 0
    // Predicated region
    $region2: #{tpu_custom_call.1} parent=1 // pred_check
      _
    $region3: #{tpu_custom_call.1} parent=1 // pred_check_branch
      %9 = sbr.rel (0) target = $region5
    $region4: #{tpu_custom_call.1} parent=1 // pred_region
      _
    $region5: #{tpu_custom_call.1} parent=1 // pred_fallthru
      _
    // Predicated region
    $region6: #{tpu_custom_call.1} parent=1 // pred_check
      _
    $region7: #{tpu_custom_call.1} parent=1 // pred_check_branch
      %11 = sbr.rel (0) target = $region9
    $region8: #{tpu_custom_call.1} parent=1 // pred_region
      _
    $region9: #{tpu_custom_call.1} parent=1 // pred_fallthru
      _
    %v12 = vld [vmem:[%s0] sm:$0x3]
    %v13 = vld [vmem:[%s1] sm:$0xff]
    %v14 = vld [vmem:[%s1 + $0x8] sm:$0xff]
    %v15 = vld [vmem:[%s1 + $0x10] sm:$0xff]
    %v16 = vld [vmem:[%s1 + $0x18] sm:$0xff]
    %v17 = vld [vmem:[%s1 + $0x20] sm:$0xff]
    %v18 = vld [vmem:[%s1 + $0x28] sm:$0xff]
    %v19 = vld [vmem:[%s1 + $0x30] sm:$0xff]
    %v20 = vld [vmem:[%s1 + $0x38] sm:$0xff]
    %v21 = vld [vmem:[%s1 + $0x40] sm:$0x1]
    %vm22 = vcmask 392192
    %v24 = vsel %vm22, %v12, 0
    %v27 = vsel %vm22, %v13, 0
    %v30 = vsel %vm22, %v14, 0
    %v33 = vsel %vm22, %v15, 0
    %v36 = vsel %vm22, %v16, 0
    %v39 = vsel %vm22, %v17, 0
    %v42 = vsel %vm22, %v18, 0
    %v45 = vsel %vm22, %v19, 0
    %v48 = vsel %vm22, %v20, 0
    %v51 = vsel %vm22, %v21, 0
    %53 = vmatpush.xpose.msra.mxu0 0.0
    %54 = vmatpush.xpose.msra.mxu0 0.0
    %55 = vmatpush.xpose.msra.mxu0 0.0
    %56 = vmatpush.xpose.msra.mxu0 0.0
    %57 = vmatpush.xpose.msra.mxu0 0.0
    %58 = vmatpush.xpose.msra.mxu0 0.0
    %59 = vmatpush.xpose.msra.mxu0 0.0
    %60 = vmatpush.xpose.msra.mxu0 %v51
    %61 = vmatpush.xpose.msra.mxu0 %v48
    %62 = vmatpush.xpose.msra.mxu0 %v45
    %63 = vmatpush.xpose.msra.mxu0 %v42
    %64 = vmatpush.xpose.msra.mxu0 %v39
    %65 = vmatpush.xpose.msra.mxu0 %v36
    %66 = vmatpush.xpose.msra.mxu0 %v33
    %67 = vmatpush.xpose.msra.mxu0 %v30
    %68 = vmatpush.xpose.msra.mxu0 %v27
    %69 = vmatmul.f32.gmra.mxu0 %v24
    %v70 = vpop.f32.mrf.mxu0
    %v71 = vadd.f32 0.0, %v70
    %72 = vdwg.mxu0
    %vm73 = vcmask 525312
    %v74 = vsel %vm73, %v71, -inf
    %75 = vmax.xlane.f32.xlu0 %v74
    %v76 = vpop.xlane.xlu0 %75
    %v77 = vsub.f32 %v71, %v76
    %v78 = vmul.f32 %v77, 1.442695
    %v79 = vpow.pop %v78
    %v80 = vsel %vm73, %v79, 0.0
    %81 = vadd.xlane.f32.xlu0 %v80
    %v82 = vpop.xlane.xlu0 %81
    %vm83 = vcmask 531456
    %v85 = vsel %vm83, %v79, 0
    %vm87 = vcmask 1040384
    %v88 = vsel %vm87, %v21, 0
    %90 = vmatpush.msra.mxu0 0.0
    %91 = vmatpush.msra.mxu0 0.0
    %92 = vmatpush.msra.mxu0 0.0
    %93 = vmatpush.msra.mxu0 0.0
    %94 = vmatpush.msra.mxu0 0.0
    %95 = vmatpush.msra.mxu0 0.0
    %96 = vmatpush.msra.mxu0 0.0
    %97 = vmatpush.msra.mxu0 %v88
    %98 = vmatpush.msra.mxu0 %v20
    %99 = vmatpush.msra.mxu0 %v19
    %100 = vmatpush.msra.mxu0 %v18
    %101 = vmatpush.msra.mxu0 %v17
    %102 = vmatpush.msra.mxu0 %v16
    %103 = vmatpush.msra.mxu0 %v15
    %104 = vmatpush.msra.mxu0 %v14
    %105 = vmatpush.msra.mxu0 %v13
    %106 = vmatmul.f32.gmra.mxu0 %v85
    %v107 = vpop.f32.mrf.mxu0
    %v108 = vadd.f32 0.0, %v107
    %109 = vdwg.mxu0
    %v110 = vrcp.pop %v82
    %v111 = vmul.f32 %v82, %v110
    %v112 = vsub.f32 1.0, %v111
    %v113 = vmul.f32 %v110, %v112
    %v114 = vadd.f32 %v110, %v113
    %vm115 = vweird.f32 %v82
    %vm116 = vweird.f32 %v110
    %vm117 = vmor %vm115, %vm116
    %v118 = vsel %vm117, %v110, %v114
    %v119 = vand.u32 2147483647, %v82
    %vm120 = vcmp.eq.f32.partialorder %v119, 8.507059e+37
    %v121 = vand.u32 %v82, 2147483648
    %v122 = vor.u32 1.1754944e-38, %v121
    %v123 = vsel %vm120, %v122, %v118
    %v124 = vmul.f32 %v108, %v123
    %vm125 = vcmask 386048
    %126 = vst.msk [vmem:[#allocation2] sm:$0x3] %vm125, %v124
    // Predicated region
    $region10: #{tpu_custom_call.1} parent=1 // pred_check
      _
    $region11: #{tpu_custom_call.1} parent=1 // pred_check_branch
      %128 = sbr.rel (0) target = $region13
    $region12: #{tpu_custom_call.1} parent=1 // pred_region
      %130 = vsyncadd [#allocation3], 0
      %s132 = sshll.u32 [#allocation2], 4
      %s133 = int_to_ptr.vmem [resolvable:$true] %s132
      %s134 = sshll.u32 %s2, 4
      %s135 = int_to_ptr.hbm [resolvable:$true] %s134
      %137 = dma.vmem_to_hbm [thread:$0]  %s133, 32, %s135, [#allocation3]
    $region13: #{tpu_custom_call.1} parent=1 // pred_fallthru
      _
    // Predicated region
    $region14: #{tpu_custom_call.1} parent=1 // pred_check
      _
    $region15: #{tpu_custom_call.1} parent=1 // pred_check_branch
      %139 = sbr.rel (0) target = $region17
    $region16: #{tpu_custom_call.1} parent=1 // pred_region
      %141 = dma.done [#allocation3], 32
    $region17: #{tpu_custom_call.1} parent=1 // pred_fallthru
      _
    %142 = vsyncpa [#allocation3], 1

</llo_original>
